<compile_context>
chip_gen: v7x
topology: tpu7x:2x2x1
jax: 0.10.0
libtpu: 0.0.40
codegen_flags: <defaults>
</compile_context>

<pallas_src>
import functools

import jax
import jax.numpy as jnp
from jax.experimental import pallas as pl
from jax.experimental.pallas import tpu as pltpu

EMBED = 8          # embed_size for each of the three embeddings
OUT_DIM = 3 * EMBED
MAX_TILE_N = 2048  # rows per grid step (multiple of 128); fits easily in VMEM


def _embed_concat_kernel(idx_ref, tabT_ref, out_ref):
    """Fused 3-way embedding lookup as one one-hot matmul (transposed).

    idx_ref : (3, TILE_N) int32, rows = (time, dis+off, speed+off), lane-dense.
    tabT_ref: (24, Vpad) float32, transposed block-diagonal combined table.
    out_ref : (24, TILE_N) float32, lane-dense output slab.
    """
    idx = idx_ref[...]                                   # (3, TILE_N)
    vpad = tabT_ref.shape[1]
    tile_n = idx.shape[1]

    # Combined one-hot in (Vpad, TILE_N) orientation. The three offset index
    # ranges are disjoint, so OR-ing the compares gives exactly one 1 per
    # stream per column.
    iota = jax.lax.broadcasted_iota(jnp.int32, (vpad, tile_n), 0)
    onehot = ((iota == idx[0:1, :]) |
              (iota == idx[1:2, :]) |
              (iota == idx[2:3, :])).astype(jnp.float32)  # (Vpad, TILE_N)

    # (24, Vpad) @ (Vpad, TILE_N) -> (24, TILE_N); single MXU push per tile.
    out_ref[...] = jnp.dot(tabT_ref[...], onehot,
                           preferred_element_type=jnp.float32)


@jax.jit
def gener_embedding_traj(time_idx, dis_idx, speed_idx,
                         time_tab, dis_tab, speed_tab):
    """time_idx/dis_idx/speed_idx: [B, S] int; *_tab: [V_i, 8] float32.

    Returns [B, S, 24] float32 = concat(time_emb, dis_emb, speed_emb, axis=-1).
    """
    B, S = time_idx.shape
    N = B * S

    V_time = time_tab.shape[0]
    V_dis = dis_tab.shape[0]
    V_speed = speed_tab.shape[0]
    V_total = V_time + V_dis + V_speed
    Vpad = max(8, ((V_total + 7) // 8) * 8)

    # Tile / padding bookkeeping (lane dim must be a multiple of 128).
    tile_n = min(MAX_TILE_N, ((N + 127) // 128) * 128)
    n_pad = ((N + tile_n - 1) // tile_n) * tile_n
    grid_n = n_pad // tile_n

    # Stacked, vocab-offset, lane-dense index array [3, Npad].
    t = time_idx.reshape(N).astype(jnp.int32)
    d = dis_idx.reshape(N).astype(jnp.int32) + V_time
    s = speed_idx.reshape(N).astype(jnp.int32) + V_time + V_dis
    idx = jnp.stack([t, d, s], axis=0)                       # (3, N)
    idx = jnp.pad(idx, ((0, 0), (0, n_pad - N)))             # pad idx = 0 (sliced off)

    # Combined block-diagonal table [Vpad, 24], then transpose -> [24, Vpad].
    tab = jnp.zeros((Vpad, OUT_DIM), jnp.float32)
    tab = tab.at[:V_time, 0 * EMBED:1 * EMBED].set(time_tab)
    tab = tab.at[V_time:V_time + V_dis, 1 * EMBED:2 * EMBED].set(dis_tab)
    tab = tab.at[V_time + V_dis:V_total, 2 * EMBED:3 * EMBED].set(speed_tab)
    tabT = tab.T                                             # (24, Vpad)

    cost = pl.CostEstimate(
        flops=2 * n_pad * Vpad * OUT_DIM,
        transcendentals=0,
        bytes_accessed=(3 * n_pad * 4            # indices in
                        + OUT_DIM * Vpad * 4     # table in
                        + OUT_DIM * n_pad * 4))  # output out

    out = pl.pallas_call(
        _embed_concat_kernel,
        out_shape=jax.ShapeDtypeStruct((OUT_DIM, n_pad), jnp.float32),
        grid=(grid_n,),
        in_specs=[
            # lane-dense stacked indices, tiled along N
            pl.BlockSpec((3, tile_n), lambda i: (0, i)),
            # combined transposed table: constant block -> stays resident
            pl.BlockSpec((OUT_DIM, Vpad), lambda i: (0, 0)),
        ],
        out_specs=pl.BlockSpec((OUT_DIM, tile_n), lambda i: (0, i)),
        compiler_params=pltpu.CompilerParams(
            dimension_semantics=("parallel",)),
        cost_estimate=cost,
    )(idx, tabT)

    # (24, Npad) -> (N, 24) -> (B, S, 24)
    return out[:, :N].T.reshape(B, S, OUT_DIM)


def _reference(time_idx, dis_idx, speed_idx, time_tab, dis_tab, speed_tab):
    return jnp.concatenate(
        (time_tab[time_idx], dis_tab[dis_idx], speed_tab[speed_idx]), axis=2)


if __name__ == "__main__":
    # config (small, synthetic)
    config = {"time_num": 16, "dis_num": 16, "speed_num": 16}
    V_time = config["time_num"] + 2
    V_dis = config["dis_num"] + 2
    V_speed = config["speed_num"] + 2

    B, S = 2, 8
    key = jax.random.PRNGKey(0)
    k_tt, k_dt, k_st, k_ti, k_di, k_si = jax.random.split(key, 6)

    # Deterministic parameter init (nn.Embedding default: N(0, 1)).
    time_tab = jax.random.normal(k_tt, (V_time, EMBED), dtype=jnp.float32)
    dis_tab = jax.random.normal(k_dt, (V_dis, EMBED), dtype=jnp.float32)
    speed_tab = jax.random.normal(k_st, (V_speed, EMBED), dtype=jnp.float32)

    # Integer index inputs (data['time'], data['dis'], data['speed']).
    time_idx = jax.random.randint(k_ti, (B, S), 0, V_time, dtype=jnp.int32)
    dis_idx = jax.random.randint(k_di, (B, S), 0, V_dis, dtype=jnp.int32)
    speed_idx = jax.random.randint(k_si, (B, S), 0, V_speed, dtype=jnp.int32)

    out = gener_embedding_traj(time_idx, dis_idx, speed_idx,
                               time_tab, dis_tab, speed_tab)
    out = jax.block_until_ready(out)

    ref = _reference(time_idx, dis_idx, speed_idx, time_tab, dis_tab, speed_tab)
    assert out.shape == (B, S, 3 * EMBED), out.shape
    assert jnp.allclose(out, ref, atol=1e-5), "mismatch vs reference"

    print("KERNEL_OK")
</pallas_src>

<mosaic_0001>
module attributes {stable_mosaic.version = 11 : i64} {
  func.func @_embed_concat_kernel(%arg0: i32, %arg1: memref<3x128xi32, #tpu.memory_space<vmem>>, %arg2: memref<24x56xf32, #tpu.memory_space<vmem>>, %arg3: memref<24x128xf32, #tpu.memory_space<vmem>>) attributes {dimension_semantics = [#tpu.dimension_semantics<parallel>], iteration_bounds = array<i64: 1>, scalar_prefetch = 0 : i64, scratch_operands = 0 : i64, tpu.core_type = #tpu.core_type<tc>, window_params = [{transform_indices = @transform_0, window_bounds = array<i64: 3, 128>}, {pipeline_mode = #tpu.pipeline_mode<synchronous>, transform_indices = @transform_1, window_bounds = array<i64: 24, 56>}, {transform_indices = @transform_2, window_bounds = array<i64: 24, 128>}]} {
    %c0 = arith.constant 0 : index
    %c0_0 = arith.constant 0 : index
    %0 = vector.load %arg1[%c0, %c0_0] : memref<3x128xi32, #tpu.memory_space<vmem>>, vector<3x128xi32>
    %1 = tpu.iota {dimensions = array<i32: 0>} : vector<56x128xi32>
    %2 = vector.extract_strided_slice %0 {offsets = [0, 0], sizes = [1, 128], strides = [1, 1]} : vector<3x128xi32> to vector<1x128xi32>
    %3 = vector.broadcast %2 : vector<1x128xi32> to vector<56x128xi32>
    %4 = arith.cmpi eq, %1, %3 : vector<56x128xi32>
    %5 = vector.extract_strided_slice %0 {offsets = [1, 0], sizes = [1, 128], strides = [1, 1]} : vector<3x128xi32> to vector<1x128xi32>
    %6 = vector.broadcast %5 : vector<1x128xi32> to vector<56x128xi32>
    %7 = arith.cmpi eq, %1, %6 : vector<56x128xi32>
    %8 = arith.ori %4, %7 : vector<56x128xi1>
    %9 = vector.extract_strided_slice %0 {offsets = [2, 0], sizes = [1, 128], strides = [1, 1]} : vector<3x128xi32> to vector<1x128xi32>
    %10 = vector.broadcast %9 : vector<1x128xi32> to vector<56x128xi32>
    %11 = arith.cmpi eq, %1, %10 : vector<56x128xi32>
    %12 = arith.ori %8, %11 : vector<56x128xi1>
    %13 = arith.extui %12 : vector<56x128xi1> to vector<56x128xi32>
    %14 = arith.sitofp %13 : vector<56x128xi32> to vector<56x128xf32>
    %c0_1 = arith.constant 0 : index
    %c0_2 = arith.constant 0 : index
    %15 = vector.load %arg2[%c0_1, %c0_2] : memref<24x56xf32, #tpu.memory_space<vmem>>, vector<24x56xf32>
    %cst = arith.constant dense<0.000000e+00> : vector<24x128xf32>
    %16 = tpu.matmul %15, %14, %cst {dimension_numbers = #tpu.dot_dimension_numbers<[1], [0], [0], [1], [0, 0, 1, 1], [], []>} : vector<24x56xf32>, vector<56x128xf32>, vector<24x128xf32> -> vector<24x128xf32>
    %c0_3 = arith.constant 0 : index
    %c0_4 = arith.constant 0 : index
    %17 = vector.load %arg3[%c0_3, %c0_4] : memref<24x128xf32, #tpu.memory_space<vmem>>, vector<24x128xf32>
    tpu.vector_store %arg3[%c0_3, %c0_4], %16 {strides = array<i32>} : memref<24x128xf32, #tpu.memory_space<vmem>>, vector<24x128xf32>,
    return
  }
  func.func @transform_0(%arg0: i32) -> (i32, i32) {
    %c0_i32 = arith.constant 0 : i32
    %c0_i32_0 = arith.constant 0 : i32
    return %c0_i32, %arg0 : i32, i32
  }
  func.func @transform_1(%arg0: i32) -> (i32, i32) {
    %c0_i32 = arith.constant 0 : i32
    %c0_i32_0 = arith.constant 0 : i32
    %c0_i32_1 = arith.constant 0 : i32
    return %c0_i32, %c0_i32_0 : i32, i32
  }
  func.func @transform_2(%arg0: i32) -> (i32, i32) {
    %c0_i32 = arith.constant 0 : i32
    %c0_i32_0 = arith.constant 0 : i32
    return %c0_i32, %arg0 : i32, i32
  }
}

</mosaic_0001>

<llo_original>
// kernel: gener_embedding_traj.1
$region0: #{gener_embedding_traj.1}
  #allocation0 [shape = 'u32[]', space=smem, size = 0x4, offset = 0x4, fixed_abs, tag = 'smem constant byte address 0x4 - core index']
  #allocation1 [shape = 'u32[144,128]{1,0:T(1,128)}', space=vmem, size = 0x12000, scoped, tag = 'internal scratch']
  %s0 = inlined_call_operand.vmem [shape: s32[3,128], index: 0, kind: input, shape index: {}]
  %s1 = inlined_call_operand.vmem [shape: f32[24,56], index: 1, kind: input, shape index: {}]
  %s2 = inlined_call_operand.vmem [shape: f32[24,128], index: 2, kind: output, shape index: {}]
  %s3 = sld [smem:[#allocation0]]
  $region18: #{gener_embedding_traj.1} parent=0
    _
  %s5 = ssub.s32 1, %s3
  %s6 = scalar_select 0, %s5, %s3
  // Predicated region
  $region2: #{gener_embedding_traj.1} parent=0 // pred_check
    _
  $region3: #{gener_embedding_traj.1} parent=0 // pred_check_branch
    %8 = sbr.rel (0) target = $region5
  $region4: #{gener_embedding_traj.1} parent=0 // pred_region
    _
  $region5: #{gener_embedding_traj.1} parent=0 // pred_fallthru
    _
  // Predicated region
  $region6: #{gener_embedding_traj.1} parent=0 // pred_check
    _
  $region7: #{gener_embedding_traj.1} parent=0 // pred_check_branch
    %10 = sbr.rel (0) target = $region9
  $region8: #{gener_embedding_traj.1} parent=0 // pred_region
    _
  $region9: #{gener_embedding_traj.1} parent=0 // pred_fallthru
    _
  %v11 = vld [vmem:[%s0] sm:$0x7]
  %v12 = vlaneseq
  %v13 = vshrl.u32 %v12, 7
  %v14 = vadd.s32 %v13, 8
  %v15 = vadd.s32 %v13, 16
  %v16 = vadd.s32 %v13, 24
  %v17 = vadd.s32 %v13, 32
  %v18 = vadd.s32 %v13, 40
  %v19 = vadd.s32 %v13, 48
  %v20 = vlaneseq
  %v21 = vshrl.u32 %v20, 7
  %v22 = vsub.s32 0, %v21
  %v23 = vrot.slane %v11, %v22
  %vm24 = vcmp.eq.s32.totalorder %v13, %v23
  %vm25 = vcmp.eq.s32.totalorder %v14, %v23
  %vm26 = vcmp.eq.s32.totalorder %v15, %v23
  %vm27 = vcmp.eq.s32.totalorder %v16, %v23
  %vm28 = vcmp.eq.s32.totalorder %v17, %v23
  %vm29 = vcmp.eq.s32.totalorder %v18, %v23
  %vm30 = vcmp.eq.s32.totalorder %v19, %v23
  %v31 = vlaneseq
  %v32 = vshrl.u32 %v31, 7
  %v33 = vsub.s32 1, %v32
  %v34 = vrot.slane %v11, %v33
  %vm35 = vcmp.eq.s32.totalorder %v13, %v34
  %vm36 = vcmp.eq.s32.totalorder %v14, %v34
  %vm37 = vcmp.eq.s32.totalorder %v15, %v34
  %vm38 = vcmp.eq.s32.totalorder %v16, %v34
  %vm39 = vcmp.eq.s32.totalorder %v17, %v34
  %vm40 = vcmp.eq.s32.totalorder %v18, %v34
  %vm41 = vcmp.eq.s32.totalorder %v19, %v34
  %vm42 = vmor %vm24, %vm35
  %vm43 = vmor %vm25, %vm36
  %vm44 = vmor %vm26, %vm37
  %vm45 = vmor %vm27, %vm38
  %vm46 = vmor %vm28, %vm39
  %vm47 = vmor %vm29, %vm40
  %vm48 = vmor %vm30, %vm41
  %v49 = vlaneseq
  %v50 = vshrl.u32 %v49, 7
  %v51 = vsub.s32 2, %v50
  %v52 = vrot.slane %v11, %v51
  %vm53 = vcmp.eq.s32.totalorder %v13, %v52
  %vm54 = vcmp.eq.s32.totalorder %v14, %v52
  %vm55 = vcmp.eq.s32.totalorder %v15, %v52
  %vm56 = vcmp.eq.s32.totalorder %v16, %v52
  %vm57 = vcmp.eq.s32.totalorder %v17, %v52
  %vm58 = vcmp.eq.s32.totalorder %v18, %v52
  %vm59 = vcmp.eq.s32.totalorder %v19, %v52
  %vm60 = vmor %vm42, %vm53
  %vm61 = vmor %vm43, %vm54
  %vm62 = vmor %vm44, %vm55
  %vm63 = vmor %vm45, %vm56
  %vm64 = vmor %vm46, %vm57
  %vm65 = vmor %vm47, %vm58
  %vm66 = vmor %vm48, %vm59
  %v67 = vsel %vm60, 1, 0
  %v68 = vsel %vm61, 1, 0
  %v69 = vsel %vm62, 1, 0
  %v70 = vsel %vm63, 1, 0
  %v71 = vsel %vm64, 1, 0
  %v72 = vsel %vm65, 1, 0
  %v73 = vsel %vm66, 1, 0
  %v74 = vcvt.s32.f32 %v67
  %v75 = vcvt.s32.f32 %v68
  %v76 = vcvt.s32.f32 %v69
  %v77 = vcvt.s32.f32 %v70
  %v78 = vcvt.s32.f32 %v71
  %v79 = vcvt.s32.f32 %v72
  %v80 = vcvt.s32.f32 %v73
  %v81 = vld [vmem:[%s1] sm:$0xff]
  %v82 = vld [vmem:[%s1 + $0x8] sm:$0xff]
  %v83 = vld [vmem:[%s1 + $0x10] sm:$0xff]
  %vm84 = vcmask 457728
  %v86 = vsel %vm84, %v81, 0
  %v89 = vsel %vm84, %v82, 0
  %v92 = vsel %vm84, %v83, 0
  %94 = vmatprep.subr.mxu0 0.0
  %95 = vmatpush1.msra.mxu0 %v74
  %96 = vmatprep.subr.mxu0 0.0
  %97 = vmatpush1.msra.mxu0 %v75
  %98 = vmatprep.subr.mxu0 0.0
  %99 = vmatpush1.msra.mxu0 %v76
  %100 = vmatprep.subr.mxu0 0.0
  %101 = vmatpush1.msra.mxu0 %v77
  %102 = vmatprep.subr.mxu0 0.0
  %103 = vmatpush1.msra.mxu0 %v78
  %104 = vmatprep.subr.mxu0 0.0
  %105 = vmatpush1.msra.mxu0 %v79
  %106 = vmatprep.subr.mxu0 0.0
  %107 = vmatpush1.msra.mxu0 %v80
  %108 = vmatprep.subr.mxu0 0.0
  %109 = vmatpush1.msra.mxu0 0.0
  %110 = vmatprep.subr.mxu0 0.0
  %111 = vmatpush1.msra.mxu0 0.0
  %112 = vmatprep.subr.mxu0 0.0
  %113 = vmatpush1.msra.mxu0 0.0
  %114 = vmatprep.subr.mxu0 0.0
  %115 = vmatpush1.msra.mxu0 0.0
  %116 = vmatprep.subr.mxu0 0.0
  %117 = vmatpush1.msra.mxu0 0.0
  %118 = vmatprep.subr.mxu0 0.0
  %119 = vmatpush1.msra.mxu0 0.0
  %120 = vmatprep.subr.mxu0 0.0
  %121 = vmatpush1.msra.mxu0 0.0
  %122 = vmatprep.subr.mxu0 0.0
  %123 = vmatpush1.msra.mxu0 0.0
  %124 = vmatprep.subr.mxu0 0.0
  %125 = vmatpush1.msra.mxu0 0.0
  %126 = vmatprep.subr.mxu0 0.0
  %127 = vmatpush1.msra.mxu0 0.0
  %128 = vmatprep.subr.mxu0 0.0
  %129 = vmatpush1.msra.mxu0 0.0
  %130 = vmatprep.subr.mxu0 0.0
  %131 = vmatpush1.msra.mxu0 0.0
  %132 = vmatprep.subr.mxu0 0.0
  %133 = vmatpush1.msra.mxu0 0.0
  %134 = vmatprep.subr.mxu0 0.0
  %135 = vmatpush1.msra.mxu0 0.0
  %136 = vmatprep.subr.mxu0 0.0
  %137 = vmatpush1.msra.mxu0 0.0
  %138 = vmatprep.subr.mxu0 0.0
  %139 = vmatpush1.msra.mxu0 0.0
  %140 = vmatprep.subr.mxu0 0.0
  %141 = vmatpush1.msra.mxu0 0.0
  %142 = vmatprep.subr.mxu0 0.0
  %143 = vmatpush1.msra.mxu0 0.0
  %144 = vmatprep.subr.mxu0 0.0
  %145 = vmatpush1.msra.mxu0 0.0
  %146 = vmatprep.subr.mxu0 0.0
  %147 = vmatpush1.msra.mxu0 0.0
  %148 = vmatprep.subr.mxu0 0.0
  %149 = vmatpush1.msra.mxu0 0.0
  %150 = vmatprep.subr.mxu0 0.0
  %151 = vmatpush1.msra.mxu0 0.0
  %152 = vmatprep.subr.mxu0 0.0
  %153 = vmatpush1.msra.mxu0 0.0
  %154 = vmatprep.subr.mxu0 0.0
  %155 = vmatpush1.msra.mxu0 0.0
  %156 = vmatprep.subr.mxu0 0.0
  %157 = vmatpush1.msra.mxu0 0.0
  %158 = vmatprep.mubr.f32.mxu0 0.0
  %159 = vmatmul.mubr.f32.gmra.mrb[0].mxu0 %v86
  %v160 = vpop.f32.mrb[0].mxu0
  %v161 = vadd.f32 0.0, %v160
  %v162 = vpop.f32.mrb[0].mxu0
  %163 = vmatprep.mubr.f32.mxu0 0.0
  %164 = vmatmul.mubr.f32.gmra.mrb[0].mxu0 %v89
  %v165 = vpop.f32.mrb[0].mxu0
  %v166 = vadd.f32 0.0, %v165
  %v167 = vpop.f32.mrb[0].mxu0
  %168 = vmatprep.mubr.f32.mxu0 0.0
  %169 = vmatmul.mubr.f32.gmra.mrb[0].mxu0 %v92
  %v170 = vpop.f32.mrb[0].mxu0
  %v171 = vadd.f32 0.0, %v170
  %v172 = vpop.f32.mrb[0].mxu0
  %173 = vdwg.mxu0
  %174 = vst [vmem:[%s2] sm:$0xff] %v161
  %175 = vst [vmem:[%s2 + $0x8] sm:$0xff] %v166
  %176 = vst [vmem:[%s2 + $0x10] sm:$0xff] %v171
  // Predicated region
  $region10: #{gener_embedding_traj.1} parent=0 // pred_check
    _
  $region11: #{gener_embedding_traj.1} parent=0 // pred_check_branch
    %178 = sbr.rel (0) target = $region13
  $region12: #{gener_embedding_traj.1} parent=0 // pred_region
    _
  $region13: #{gener_embedding_traj.1} parent=0 // pred_fallthru
    _
  // Predicated region
  $region14: #{gener_embedding_traj.1} parent=0 // pred_check
    _
  $region15: #{gener_embedding_traj.1} parent=0 // pred_check_branch
    %180 = sbr.rel (0) target = $region17
  $region16: #{gener_embedding_traj.1} parent=0 // pred_region
    _
  $region17: #{gener_embedding_traj.1} parent=0 // pred_fallthru
    _

</llo_original>
